<compile_context>
chip_gen: v7x
topology: tpu7x:2x2x1
jax: 0.10.0
libtpu: 0.0.40
codegen_flags: <defaults>
</compile_context>

<pallas_src>
import jax
import jax.numpy as jnp
from jax.experimental import pallas as pl
from jax.experimental.pallas import tpu as pltpu

LANE = 128
_SUBLANE = {4: 8, 2: 16, 1: 32}  # sublane pack per itemsize (f32 / bf16 / i8)


def _bias_kernel(x_ref, b_ref, o_ref):
    # x_ref: (TB, F) VMEM tile; b_ref: (1, F) resident bias (broadcast over rows).
    o_ref[...] = x_ref[...] + b_ref[...]


def _round_up(x, m):
    return ((x + m - 1) // m) * m


def bias_forward(x, bias_param, lr_mul=1.0, *,
                 vmem_budget_bytes=24 * 1024 * 1024,
                 min_pallas_bytes=1 << 20,
                 force_pallas=False):
    """x: (B, F); bias_param: (1, F); returns x + bias_param * lr_mul."""
    B, F = x.shape
    assert bias_param.shape == (1, F)
    dtype = x.dtype
    itemsize = jnp.dtype(dtype).itemsize

    # Fold the static lr_mul into the tiny (1, F) bias in the wrapper.
    scaled_bias = (bias_param.astype(jnp.float32) * float(lr_mul)).astype(dtype)

    # Fast path: tiny problems (custom-call launch dominates, and XLA can fuse
    # the add into a producer matmul) or dtypes we don't tile for.
    if itemsize not in _SUBLANE or (B * F * itemsize < min_pallas_bytes
                                    and not force_pallas):
        return x + scaled_bias

    sublane = _SUBLANE[itemsize]

    # Row-packing for narrow feature dims: fold k = 128 // F batch rows into
    # one lane-dense row (free row-major reshape, tiny tiled bias).
    pack = 1
    if F < LANE and LANE % F == 0 and B % (LANE // F) == 0:
        pack = LANE // F
    if pack > 1:
        x_eff = x.reshape(B // pack, pack * F)
        b_eff = jnp.tile(scaled_bias, (1, pack))
    else:
        x_eff, b_eff = x, scaled_bias
    B_eff, F_eff = x_eff.shape

    # TB: largest sublane multiple s.t. in+out tiles, double-buffered (4 copies),
    # fit the VMEM budget; cap at 1024 rows, and cap so the grid has >= ~4 steps
    # when the batch allows it (pipelining + both v7x TensorCores).
    max_rows = max(sublane, vmem_budget_bytes // (4 * F_eff * itemsize))
    TB = min((max_rows // sublane) * sublane, 1024)
    TB = min(TB, max(sublane, _round_up(pl.cdiv(B_eff, 4), sublane)))
    TB = max(TB, sublane)

    grid = (pl.cdiv(B_eff, TB),)  # ragged tail block handled by Pallas masking

    # VMEM limit derived from actual usage (+ slack); lifts v5e's 16 MiB default
    # when needed without over-reserving, and stays well inside v7x's 64 MiB.
    vmem_needed = 4 * TB * F_eff * itemsize + 2 * F_eff * itemsize + (1 << 20)
    vmem_limit = int(min(max(vmem_needed, 16 * 1024 * 1024), 48 * 1024 * 1024))

    out = pl.pallas_call(
        _bias_kernel,
        out_shape=jax.ShapeDtypeStruct((B_eff, F_eff), dtype),
        grid=grid,
        in_specs=[
            pl.BlockSpec((TB, F_eff), lambda i: (i, 0)),   # activations tile
            pl.BlockSpec((1, F_eff), lambda i: (0, 0)),    # scaled bias (resident)
        ],
        out_specs=pl.BlockSpec((TB, F_eff), lambda i: (i, 0)),
        compiler_params=pltpu.CompilerParams(
            dimension_semantics=("parallel",),             # megacore split on v7x
            vmem_limit_bytes=vmem_limit,
        ),
        cost_estimate=pl.CostEstimate(
            flops=B_eff * F_eff,
            transcendentals=0,
            bytes_accessed=(2 * B_eff * F_eff + F_eff) * itemsize,
        ),
    )(x_eff, b_eff)

    if pack > 1:
        out = out.reshape(B, F)
    return out


class BiasJax:
    """Mirror of the PyTorch Bias module with deterministic init."""

    def __init__(self, num_features, init_value=0.0, lr_mul=1.0, dtype=jnp.float32):
        # nn.init.constant_(param, init_value)
        self.param = jnp.full((1, num_features), init_value, dtype=dtype)
        self.scale = lr_mul

    def __call__(self, x, *, force_pallas=False):
        return bias_forward(x, self.param, self.scale, force_pallas=force_pallas)


if __name__ == "__main__":
    key = jax.random.PRNGKey(0)

    # Small shape implied by the module: batch=2, num_features=32.
    B, F = 2, 32
    x = jax.random.normal(key, (B, F), dtype=jnp.float32)
    module = BiasJax(F, init_value=0.5, lr_mul=0.01)
    out = jax.block_until_ready(module(x, force_pallas=True))  # exercise the kernel
    ref = x + module.param * 0.01
    assert out.shape == x.shape
    assert jnp.allclose(out, ref, atol=1e-6), "mismatch vs reference (small)"

    # Mid-size aligned shape -> multi-step grid (pipelined, both TCs on v7x).
    x2 = jax.random.normal(jax.random.PRNGKey(1), (1024, 512), dtype=jnp.float32)
    m2 = BiasJax(512, init_value=-0.25, lr_mul=0.5)
    out2 = jax.block_until_ready(m2(x2))
    assert jnp.allclose(out2, x2 + m2.param * 0.5, atol=1e-6), "mismatch (mid)"

    # Ragged shape (B not a TB multiple, F not a lane multiple) -> partial blocks.
    x3 = jax.random.normal(jax.random.PRNGKey(2), (250, 96), dtype=jnp.float32)
    m3 = BiasJax(96, init_value=0.1, lr_mul=2.0)
    out3 = jax.block_until_ready(m3(x3, force_pallas=True))
    assert jnp.allclose(out3, x3 + m3.param * 2.0, atol=1e-6), "mismatch (ragged)"

    # Narrow feature dim (bf16) -> row-packing path (k = 128 // F rows per lane-row).
    x4 = jax.random.normal(jax.random.PRNGKey(3), (256, 32), dtype=jnp.bfloat16)
    m4 = BiasJax(32, init_value=0.25, lr_mul=0.5, dtype=jnp.bfloat16)
    out4 = jax.block_until_ready(m4(x4, force_pallas=True))
    ref4 = x4 + (m4.param.astype(jnp.float32) * 0.5).astype(jnp.bfloat16)
    assert jnp.allclose(out4.astype(jnp.float32), ref4.astype(jnp.float32),
                        atol=1e-2), "mismatch (packed bf16)"

    print("KERNEL_OK")
</pallas_src>

<mosaic_0001>
module attributes {stable_mosaic.version = 11 : i64} {
  func.func @_bias_kernel(%arg0: i32, %arg1: memref<8x32xf32, #tpu.memory_space<vmem>>, %arg2: memref<1x32xf32, #tpu.memory_space<vmem>>, %arg3: memref<8x32xf32, #tpu.memory_space<vmem>>) attributes {dimension_semantics = [#tpu.dimension_semantics<parallel>], iteration_bounds = array<i64: 1>, scalar_prefetch = 0 : i64, scratch_operands = 0 : i64, tpu.core_type = #tpu.core_type<tc>, window_params = [{transform_indices = @transform_0, window_bounds = array<i64: 8, 32>}, {pipeline_mode = #tpu.pipeline_mode<synchronous>, transform_indices = @transform_1, window_bounds = array<i64: 1, 32>}, {transform_indices = @transform_2, window_bounds = array<i64: 8, 32>}]} {
    %c0 = arith.constant 0 : index
    %c0_0 = arith.constant 0 : index
    %0 = vector.load %arg1[%c0, %c0_0] : memref<8x32xf32, #tpu.memory_space<vmem>>, vector<8x32xf32>
    %c0_1 = arith.constant 0 : index
    %c0_2 = arith.constant 0 : index
    %1 = vector.load %arg2[%c0_1, %c0_2] : memref<1x32xf32, #tpu.memory_space<vmem>>, vector<1x32xf32>
    %2 = vector.broadcast %1 : vector<1x32xf32> to vector<8x32xf32>
    %3 = arith.addf %0, %2 : vector<8x32xf32>
    %c0_3 = arith.constant 0 : index
    %c0_4 = arith.constant 0 : index
    %4 = vector.load %arg3[%c0_3, %c0_4] : memref<8x32xf32, #tpu.memory_space<vmem>>, vector<8x32xf32>
    tpu.vector_store %arg3[%c0_3, %c0_4], %3 {strides = array<i32>} : memref<8x32xf32, #tpu.memory_space<vmem>>, vector<8x32xf32>,
    return
  }
  func.func @transform_0(%arg0: i32) -> (i32, i32) {
    %c0_i32 = arith.constant 0 : i32
    %c0_i32_0 = arith.constant 0 : i32
    return %arg0, %c0_i32 : i32, i32
  }
  func.func @transform_1(%arg0: i32) -> (i32, i32) {
    %c0_i32 = arith.constant 0 : i32
    %c0_i32_0 = arith.constant 0 : i32
    %c0_i32_1 = arith.constant 0 : i32
    return %c0_i32, %c0_i32_0 : i32, i32
  }
  func.func @transform_2(%arg0: i32) -> (i32, i32) {
    %c0_i32 = arith.constant 0 : i32
    %c0_i32_0 = arith.constant 0 : i32
    return %arg0, %c0_i32 : i32, i32
  }
}

</mosaic_0001>

<llo_original>
// kernel: tpu_custom_call.1
$region0: #{tpu_custom_call.1}
  #allocation0 [shape = 'u32[]', space=smem, size = 0x4, offset = 0x4, fixed_abs, tag = 'smem constant byte address 0x4 - core index']
  #allocation1 [shape = 'u32[144,128]{1,0:T(1,128)}', space=vmem, size = 0x12000, scoped, tag = 'internal scratch']
  %s0 = inlined_call_operand.hbm [shape: f32[2,32], index: 0, kind: input, shape index: {}]
  %s1 = inlined_call_operand.vmem [shape: f32[1,32], index: 1, kind: input, shape index: {}]
  %s2 = inlined_call_operand.hbm [shape: f32[2,32], index: 2, kind: output, shape index: {}]
  %s3 = sld [smem:[#allocation0]]
  $region22: #{tpu_custom_call.1} parent=0
    _
  %s5 = ssub.s32 1, %s3
  %s6 = scalar_select 0, %s5, %s3
  $region1: #{tpu_custom_call.1} parent=0
    #allocation2 [shape = 'u8[4096]{0}', space=vmem, size = 0x1000, scoped, tag = 'input window, operand 0, single buffered']
    #allocation3 [shape = 's32[1]{0}', space=sflag, size = 0x4, scoped, tag = 'scoped memory for tpu_custom_call.1']
    #allocation4 [shape = 's32[1]{0}', space=sflag, size = 0x4, scoped, tag = 'scoped memory for tpu_custom_call.1']
    #allocation5 [shape = 'u8[4096]{0}', space=vmem, size = 0x1000, scoped, tag = 'output window, operand 0, single buffered']
    %7 = vsyncpa [#allocation3], 0
    %8 = vsyncpa [#allocation4], 0
    // Predicated region
    $region2: #{tpu_custom_call.1} parent=1 // pred_check
      _
    $region3: #{tpu_custom_call.1} parent=1 // pred_check_branch
      %10 = sbr.rel (0) target = $region5
    $region4: #{tpu_custom_call.1} parent=1 // pred_region
      %s12 = ssub.s32 128, 32
      %13 = vsyncadd [#allocation3], %s12
      %s14 = sshll.u32 [#allocation2], 4
      %s15 = int_to_ptr.vmem [resolvable:$true] %s14
      %20 = dma.hbm_to_vmem [thread:$0]  %s0, 32, %s15, [#allocation3], 32, 32, 2
    $region5: #{tpu_custom_call.1} parent=1 // pred_fallthru
      _
    // Predicated region
    $region6: #{tpu_custom_call.1} parent=1 // pred_check
      _
    $region7: #{tpu_custom_call.1} parent=1 // pred_check_branch
      %22 = sbr.rel (0) target = $region9
    $region8: #{tpu_custom_call.1} parent=1 // pred_region
      _
    $region9: #{tpu_custom_call.1} parent=1 // pred_fallthru
      _
    // Predicated region
    $region10: #{tpu_custom_call.1} parent=1 // pred_check
      _
    $region11: #{tpu_custom_call.1} parent=1 // pred_check_branch
      %24 = sbr.rel (0) target = $region13
    $region12: #{tpu_custom_call.1} parent=1 // pred_region
      %25 = dma.done [#allocation3], 128
    $region13: #{tpu_custom_call.1} parent=1 // pred_fallthru
      _
    %v26 = vld [vmem:[#allocation2] sm:$0xff]
    %v27 = vld [vmem:[%s1] sm:$0x1]
    %v29 = vlaneseq
    %v30 = vshrl.u32 %v29, 7
    %v31 = vsub.s32 0, %v30
    %v32 = vrot.slane %v27, %v31
    %v34 = vadd.f32 %v26, %v32
    %vm35 = vcmask 261120
    %36 = vst.msk [vmem:[#allocation5] sm:$0xff] %vm35, %v34
    // Predicated region
    $region14: #{tpu_custom_call.1} parent=1 // pred_check
      _
    $region15: #{tpu_custom_call.1} parent=1 // pred_check_branch
      %38 = sbr.rel (0) target = $region17
    $region16: #{tpu_custom_call.1} parent=1 // pred_region
      %s40 = ssub.s32 128, 32
      %41 = vsyncadd [#allocation4], %s40
      %s42 = sshll.u32 [#allocation5], 4
      %s43 = int_to_ptr.vmem [resolvable:$true] %s42
      %48 = dma.vmem_to_hbm [thread:$0]  %s43, 32, %s2, [#allocation4], 32, 32, 2
    $region17: #{tpu_custom_call.1} parent=1 // pred_fallthru
      _
    // Predicated region
    $region18: #{tpu_custom_call.1} parent=1 // pred_check
      _
    $region19: #{tpu_custom_call.1} parent=1 // pred_check_branch
      %50 = sbr.rel (0) target = $region21
    $region20: #{tpu_custom_call.1} parent=1 // pred_region
      %51 = dma.done [#allocation4], 128
    $region21: #{tpu_custom_call.1} parent=1 // pred_fallthru
      _
    %52 = vsyncpa [#allocation3], 1
    %53 = vsyncpa [#allocation4], 1

</llo_original>
